<compile_context>
chip_gen: v7x
topology: tpu7x:2x2x1
jax: 0.10.0
libtpu: 0.0.40
codegen_flags: <defaults>
</compile_context>

<pallas_src>
import jax
import jax.numpy as jnp
from jax.experimental import pallas as pl
from jax.experimental.pallas import tpu as pltpu

GAMMA_NEG = 4.0
GAMMA_POS = 1.0
CLIP = 0.05
EPS = 1e-8

_PAD_LOGIT = 30.0   # sigmoid(30) == 1.0 exactly in f32 -> log term 0, weight 0
_PAD_TARGET = 1


def _round_up(a, b):
    return -(-a // b) * b


def _vmem_capacity_bytes():
    try:
        info = pltpu.get_tpu_info()
        cap = getattr(info, "vmem_capacity_bytes", None)
        if cap:
            return int(cap)
    except Exception:
        pass
    return 64 * 1024 * 1024  # conservative default: fits every generation (v7x = 64 MiB)


def _asl_kernel(x_ref, y_ref, out_ref):
    r = pl.program_id(1)

    x = x_ref[...].astype(jnp.float32)
    pos = y_ref[...] > 0                          # predicate on native dtype, no f32 cast

    # sigmoid(x) = 0.5 * tanh(0.5 * x) + 0.5  (one EUP op instead of exp + recip)
    xs_pos = 0.5 * jnp.tanh(0.5 * x) + 0.5
    xs_neg_raw = 1.0 - xs_pos
    xs_neg = jnp.minimum(xs_neg_raw + CLIP, 1.0)  # xs_neg.add_(clip).clamp_(max=1)

    # BCE term: only the selected branch's log is needed (single EUP log).
    prob = jnp.where(pos, xs_pos, xs_neg)
    logp = jnp.log(jnp.maximum(prob, EPS))

    # Asymmetric focusing weight, pow-free (targets are binary):
    #   y == 1: (1 - xs_pos)^gamma_pos = xs_neg_raw       (gamma_pos = 1)
    #   y == 0: (1 - xs_neg)^gamma_neg = b*b*b*b          (gamma_neg = 4)
    b = 1.0 - xs_neg
    b2 = b * b
    w = jnp.where(pos, xs_neg_raw, b2 * b2)

    contrib = logp * w                            # (TM, W)

    # Fold the tile onto the resident (8, W) output block.  The reshape maps
    # exactly onto the existing (8, 128) vreg tiling, so this is pure VPU adds.
    tm, lanes = contrib.shape
    partial = jnp.sum(contrib.reshape(tm // 8, 8, lanes), axis=0)

    @pl.when(r == 0)
    def _():
        out_ref[...] = partial                    # overwrite: no zero-init pass

    @pl.when(r != 0)
    def _():
        out_ref[...] += partial


def asymmetric_loss(x, y, *, max_tile_rows=None):
    """AsymmetricLossOptimized.forward(x, y) -> f32 scalar (-loss.sum()).

    x: [B, C] float logits (f32 or bf16); y: [B, C] binarized targets (any
    float/int/bool dtype).  x is cast to f32 inside the kernel; y is only read
    as a predicate, so bf16 x + int8/bool y is the HBM-cheap fast path.
    """
    assert x.shape == y.shape and x.ndim == 2
    assert jnp.issubdtype(x.dtype, jnp.floating)
    B, C = x.shape
    N = B * C

    # ---- lane-dense slab layout -------------------------------------------
    # Pick the widest lane width that divides N exactly (no pad copy); ragged
    # sizes fall back to W=128 and get padded with zero-contribution elements.
    W = 128
    for cand in (1024, 512, 256, 128):
        if N >= cand and N % cand == 0:
            W = cand
            break
    R_raw = -(-N // W)                      # rows before padding

    # ---- two-TensorCore split (v7x); free on single-core chips -------------
    NSPLIT = 2 if R_raw >= 64 else 1
    rows_per_split = -(-R_raw // NSPLIT)

    # ---- tile rows from a generation-aware VMEM budget ----------------------
    vmem_cap = _vmem_capacity_bytes()
    budget = int(vmem_cap * 0.75)           # headroom for Mosaic internal scratch
    bytes_per_row = W * (x.dtype.itemsize + y.dtype.itemsize)
    tm_budget = max(32, (budget // (2 * bytes_per_row) // 32) * 32)  # 2x double buffer
    TM = min(tm_budget, _round_up(rows_per_split, 32))
    if max_tile_rows is not None:
        TM = min(TM, max(32, _round_up(max_tile_rows, 32)))
    TM = max(32, (TM // 32) * 32)           # 32-row align: legal for int8/bf16 packing

    R_split = _round_up(rows_per_split, TM)  # rows per split, padded to a tile multiple
    steps = R_split // TM
    R_total = NSPLIT * R_split
    N_padded = R_total * W

    # ---- pad with elements that contribute exactly 0 (x=+30, y=1) ----------
    xf = x.reshape(-1)
    yf = y.reshape(-1)
    pad = N_padded - N
    if pad:
        xf = jnp.concatenate([xf, jnp.full((pad,), _PAD_LOGIT, xf.dtype)])
        yf = jnp.concatenate([yf, jnp.full((pad,), _PAD_TARGET, yf.dtype)])
    x2 = xf.reshape(R_total, W)
    y2 = yf.reshape(R_total, W)

    needed = 2 * TM * bytes_per_row + 2 * (8 * W * 4) + (4 << 20)
    vmem_limit = int(min(max(needed, 32 << 20), int(vmem_cap * 0.9)))

    partials = pl.pallas_call(
        _asl_kernel,
        out_shape=jax.ShapeDtypeStruct((NSPLIT * 8, W), jnp.float32),
        grid_spec=pltpu.PrefetchScalarGridSpec(
            num_scalar_prefetch=0,
            grid=(NSPLIT, steps),
            in_specs=[
                pl.BlockSpec((TM, W), lambda c, r, s=steps: (c * s + r, 0)),
                pl.BlockSpec((TM, W), lambda c, r, s=steps: (c * s + r, 0)),
            ],
            out_specs=pl.BlockSpec((8, W), lambda c, r: (c, 0)),
        ),
        compiler_params=pltpu.CompilerParams(
            dimension_semantics=("parallel", "arbitrary"),
            vmem_limit_bytes=vmem_limit,
        ),
    )(x2, y2)

    # Tiny final cross-lane reduce + negate on (NSPLIT*8, W) lane partials.
    return -jnp.sum(partials)


def _reference(x, y):
    # Pure-JAX reference mirroring the PyTorch forward exactly (incl. pow).
    x = x.astype(jnp.float32)
    y = y.astype(jnp.float32)
    anti = 1.0 - y
    xs_pos = jax.nn.sigmoid(x)
    xs_neg = jnp.minimum(1.0 - xs_pos + CLIP, 1.0)
    loss = y * jnp.log(jnp.maximum(xs_pos, EPS))
    loss = loss + anti * jnp.log(jnp.maximum(xs_neg, EPS))
    w = jnp.power(1.0 - xs_pos * y - xs_neg * anti,
                  GAMMA_POS * y + GAMMA_NEG * anti)
    return -jnp.sum(loss * w)


if __name__ == "__main__":
    key = jax.random.PRNGKey(0)
    k1, k2, k3, k4 = jax.random.split(key, 4)

    # 1) VOC-like small shape (20 classes): ragged C -> flatten + pad, single block.
    B, C = 16, 20
    x = jax.random.normal(k1, (B, C), dtype=jnp.float32) * 2.0
    y = (jax.random.uniform(k2, (B, C)) < 0.3).astype(jnp.float32)
    out = jax.block_until_ready(asymmetric_loss(x, y))
    ref = jax.block_until_ready(_reference(x, y))
    assert jnp.allclose(out, ref, rtol=1e-3, atol=1e-2), (out, ref)

    # 2) Larger ragged shape: multi-step reduction axis + 2-way parallel split
    #    (max_tile_rows forces TM=32 so grid = (2, 2) with padded rows).
    B2, C2 = 640, 160
    x2 = jax.random.normal(k3, (B2, C2), dtype=jnp.float32) * 2.0
    y2 = (jax.random.uniform(k4, (B2, C2)) < 0.3).astype(jnp.float32)
    out2 = jax.block_until_ready(asymmetric_loss(x2, y2, max_tile_rows=32))
    ref2 = jax.block_until_ready(_reference(x2, y2))
    assert jnp.allclose(out2, ref2, rtol=1e-3, atol=1e-1), (out2, ref2)

    # 3) Fast dtype path: bf16 logits + int8 targets (no y cast inside the kernel).
    xb = x2[:256, :128].astype(jnp.bfloat16)
    yb = y2[:256, :128].astype(jnp.int8)
    out3 = jax.block_until_ready(asymmetric_loss(xb, yb))
    ref3 = jax.block_until_ready(_reference(xb, yb))
    assert jnp.allclose(out3, ref3, rtol=2e-2, atol=1.0), (out3, ref3)

    print("KERNEL_OK")
</pallas_src>

<mosaic_0001>
module attributes {stable_mosaic.version = 11 : i64} {
  func.func @_asl_kernel(%arg0: i32, %arg1: i32, %arg2: memref<32x128xf32, #tpu.memory_space<vmem>>, %arg3: memref<32x128xf32, #tpu.memory_space<vmem>>, %arg4: memref<8x128xf32, #tpu.memory_space<vmem>>) attributes {dimension_semantics = [#tpu.dimension_semantics<parallel>, #tpu.dimension_semantics<arbitrary>], iteration_bounds = array<i64: 1, 1>, scalar_prefetch = 0 : i64, scratch_operands = 0 : i64, tpu.core_type = #tpu.core_type<tc>, window_params = [{transform_indices = @transform_0, window_bounds = array<i64: 32, 128>}, {transform_indices = @transform_1, window_bounds = array<i64: 32, 128>}, {transform_indices = @transform_2, window_bounds = array<i64: 8, 128>}]} {
    %c0 = arith.constant 0 : index
    %c0_0 = arith.constant 0 : index
    %0 = vector.load %arg2[%c0, %c0_0] : memref<32x128xf32, #tpu.memory_space<vmem>>, vector<32x128xf32>
    %c0_1 = arith.constant 0 : index
    %c0_2 = arith.constant 0 : index
    %1 = vector.load %arg3[%c0_1, %c0_2] : memref<32x128xf32, #tpu.memory_space<vmem>>, vector<32x128xf32>
    %cst = arith.constant 0.000000e+00 : f32
    %2 = vector.broadcast %cst : f32 to vector<32x128xf32>
    %3 = arith.cmpf ogt, %1, %2 : vector<32x128xf32>
    %cst_3 = arith.constant 5.000000e-01 : f32
    %4 = vector.broadcast %cst_3 : f32 to vector<32x128xf32>
    %5 = arith.mulf %4, %0 : vector<32x128xf32>
    %6 = math.tanh %5 : vector<32x128xf32>
    %cst_4 = arith.constant 5.000000e-01 : f32
    %7 = vector.broadcast %cst_4 : f32 to vector<32x128xf32>
    %8 = arith.mulf %7, %6 : vector<32x128xf32>
    %cst_5 = arith.constant 5.000000e-01 : f32
    %9 = vector.broadcast %cst_5 : f32 to vector<32x128xf32>
    %10 = arith.addf %8, %9 : vector<32x128xf32>
    %cst_6 = arith.constant 1.000000e+00 : f32
    %11 = vector.broadcast %cst_6 : f32 to vector<32x128xf32>
    %12 = arith.subf %11, %10 : vector<32x128xf32>
    %cst_7 = arith.constant 5.000000e-02 : f32
    %13 = vector.broadcast %cst_7 : f32 to vector<32x128xf32>
    %14 = arith.addf %12, %13 : vector<32x128xf32>
    %cst_8 = arith.constant 1.000000e+00 : f32
    %15 = vector.broadcast %cst_8 : f32 to vector<32x128xf32>
    %16 = arith.minimumf %14, %15 : vector<32x128xf32>
    %17 = arith.select %3, %10, %16 : vector<32x128xi1>, vector<32x128xf32>
    %cst_9 = arith.constant 9.99999993E-9 : f32
    %18 = vector.broadcast %cst_9 : f32 to vector<32x128xf32>
    %19 = arith.maximumf %17, %18 : vector<32x128xf32>
    %20 = math.log %19 : vector<32x128xf32>
    %cst_10 = arith.constant 1.000000e+00 : f32
    %21 = vector.broadcast %cst_10 : f32 to vector<32x128xf32>
    %22 = arith.subf %21, %16 : vector<32x128xf32>
    %23 = arith.mulf %22, %22 : vector<32x128xf32>
    %24 = arith.mulf %23, %23 : vector<32x128xf32>
    %25 = arith.select %3, %12, %24 : vector<32x128xi1>, vector<32x128xf32>
    %26 = arith.mulf %20, %25 : vector<32x128xf32>
    %27 = vector.shape_cast %26 : vector<32x128xf32> to vector<4x8x128xf32>
    %cst_11 = arith.constant dense<0.000000e+00> : vector<8x128xf32>
    %28 = vector.multi_reduction <add>, %27, %cst_11 [0] : vector<4x8x128xf32> to vector<8x128xf32>
    %c0_i32 = arith.constant 0 : i32
    %29 = arith.cmpi eq, %arg1, %c0_i32 : i32
    %30 = arith.extui %29 : i1 to i32
    %c0_i32_12 = arith.constant 0 : i32
    %31 = arith.cmpi ne, %30, %c0_i32_12 : i32
    scf.if %31 {
      %c0_15 = arith.constant 0 : index
      %c0_16 = arith.constant 0 : index
      %35 = vector.load %arg4[%c0_15, %c0_16] : memref<8x128xf32, #tpu.memory_space<vmem>>, vector<8x128xf32>
      tpu.vector_store %arg4[%c0_15, %c0_16], %28 {strides = array<i32>} : memref<8x128xf32, #tpu.memory_space<vmem>>, vector<8x128xf32>,
    } else {
    }
    %c0_i32_13 = arith.constant 0 : i32
    %32 = arith.cmpi ne, %arg1, %c0_i32_13 : i32
    %33 = arith.extui %32 : i1 to i32
    %c0_i32_14 = arith.constant 0 : i32
    %34 = arith.cmpi ne, %33, %c0_i32_14 : i32
    scf.if %34 {
      %c0_15 = arith.constant 0 : index
      %c0_16 = arith.constant 0 : index
      %35 = vector.load %arg4[%c0_15, %c0_16] : memref<8x128xf32, #tpu.memory_space<vmem>>, vector<8x128xf32>
      %36 = arith.addf %35, %28 : vector<8x128xf32>
      %c0_17 = arith.constant 0 : index
      %c0_18 = arith.constant 0 : index
      %37 = vector.load %arg4[%c0_17, %c0_18] : memref<8x128xf32, #tpu.memory_space<vmem>>, vector<8x128xf32>
      tpu.vector_store %arg4[%c0_17, %c0_18], %36 {strides = array<i32>} : memref<8x128xf32, #tpu.memory_space<vmem>>, vector<8x128xf32>,
    } else {
    }
    return
  }
  func.func @transform_0(%arg0: i32, %arg1: i32) -> (i32, i32) {
    %c1_i32 = arith.constant 1 : i32
    %0 = arith.muli %arg0, %c1_i32 : i32
    %1 = arith.addi %0, %arg1 : i32
    %c0_i32 = arith.constant 0 : i32
    %c0_i32_0 = arith.constant 0 : i32
    return %1, %c0_i32 : i32, i32
  }
  func.func @transform_1(%arg0: i32, %arg1: i32) -> (i32, i32) {
    %c1_i32 = arith.constant 1 : i32
    %0 = arith.muli %arg0, %c1_i32 : i32
    %1 = arith.addi %0, %arg1 : i32
    %c0_i32 = arith.constant 0 : i32
    %c0_i32_0 = arith.constant 0 : i32
    return %1, %c0_i32 : i32, i32
  }
  func.func @transform_2(%arg0: i32, %arg1: i32) -> (i32, i32) {
    %c0_i32 = arith.constant 0 : i32
    %c0_i32_0 = arith.constant 0 : i32
    return %arg0, %c0_i32 : i32, i32
  }
}

</mosaic_0001>

<llo_original>
// kernel: tpu_custom_call.1
$region0: #{tpu_custom_call.1}
  #allocation0 [shape = 'u32[]', space=smem, size = 0x4, offset = 0x4, fixed_abs, tag = 'smem constant byte address 0x4 - core index']
  #allocation1 [shape = 'u32[144,128]{1,0:T(1,128)}', space=vmem, size = 0x12000, scoped, tag = 'internal scratch']
  %s0 = inlined_call_operand.hbm [shape: f32[32,128], index: 0, kind: input, shape index: {}]
  %s1 = inlined_call_operand.hbm [shape: f32[32,128], index: 1, kind: input, shape index: {}]
  %s2 = inlined_call_operand.hbm [shape: f32[8,128], index: 2, kind: output, shape index: {}]
  %s3 = sld [smem:[#allocation0]]
  $region34: #{tpu_custom_call.1} parent=0
    _
  %s5 = ssub.s32 1, %s3
  %s6 = scalar_select 0, %s5, %s3
  $region1: #{tpu_custom_call.1} parent=0
    #allocation2 [shape = 'u8[16384]{0}', space=vmem, size = 0x4000, scoped, tag = 'input window, operand 0, single buffered']
    #allocation3 [shape = 's32[1]{0}', space=sflag, size = 0x4, scoped, tag = 'scoped memory for tpu_custom_call.1']
    #allocation4 [shape = 's32[1]{0}', space=sflag, size = 0x4, scoped, tag = 'scoped memory for tpu_custom_call.1']
    #allocation5 [shape = 'u8[16384]{0}', space=vmem, size = 0x4000, scoped, tag = 'input window, operand 1, single buffered']
    #allocation6 [shape = 's32[1]{0}', space=sflag, size = 0x4, scoped, tag = 'scoped memory for tpu_custom_call.1']
    #allocation7 [shape = 'u8[4096]{0}', space=vmem, size = 0x1000, scoped, tag = 'output window, operand 0, single buffered']
    %7 = vsyncpa [#allocation3], 0
    %8 = vsyncpa [#allocation6], 0
    %9 = vsyncpa [#allocation4], 0
    // Predicated region
    $region2: #{tpu_custom_call.1} parent=1 // pred_check
      _
    $region3: #{tpu_custom_call.1} parent=1 // pred_check_branch
      %11 = sbr.rel (0) target = $region5
    $region4: #{tpu_custom_call.1} parent=1 // pred_region
      %s12 = sadd.s32 0, 0
      %s13 = smul.u32 4, %s12
      %s15 = ssub.s32 512, 512
      %16 = vsyncadd [#allocation3], %s15
      %s17 = smul.addr %s13, 128
      %s18 = scalar_lea.hbm %s0, %s17
      %s19 = sshll.u32 [#allocation2], 4
      %s20 = int_to_ptr.vmem [resolvable:$true] %s19
      %25 = dma.hbm_to_vmem [thread:$0]  %s18, 512, %s20, [#allocation3], 128, 128, 8
    $region5: #{tpu_custom_call.1} parent=1 // pred_fallthru
      _
    // Predicated region
    $region6: #{tpu_custom_call.1} parent=1 // pred_check
      _
    $region7: #{tpu_custom_call.1} parent=1 // pred_check_branch
      %27 = sbr.rel (0) target = $region9
    $region8: #{tpu_custom_call.1} parent=1 // pred_region
      %s28 = sadd.s32 0, 0
      %s29 = smul.u32 4, %s28
      %s31 = ssub.s32 512, 512
      %32 = vsyncadd [#allocation6], %s31
      %s33 = smul.addr %s29, 128
      %s34 = scalar_lea.hbm %s1, %s33
      %s35 = sshll.u32 [#allocation5], 4
      %s36 = int_to_ptr.vmem [resolvable:$true] %s35
      %41 = dma.hbm_to_vmem [thread:$0]  %s34, 512, %s36, [#allocation6], 128, 128, 8
    $region9: #{tpu_custom_call.1} parent=1 // pred_fallthru
      _
    // Predicated region
    $region10: #{tpu_custom_call.1} parent=1 // pred_check
      _
    $region11: #{tpu_custom_call.1} parent=1 // pred_check_branch
      %43 = sbr.rel (0) target = $region13
    $region12: #{tpu_custom_call.1} parent=1 // pred_region
      %44 = dma.done [#allocation3], 512
    $region13: #{tpu_custom_call.1} parent=1 // pred_fallthru
      _
    // Predicated region
    $region14: #{tpu_custom_call.1} parent=1 // pred_check
      _
    $region15: #{tpu_custom_call.1} parent=1 // pred_check_branch
      %46 = sbr.rel (0) target = $region17
    $region16: #{tpu_custom_call.1} parent=1 // pred_region
      %47 = dma.done [#allocation6], 512
    $region17: #{tpu_custom_call.1} parent=1 // pred_fallthru
      _
    %s48 = sadd.s32 0, 0
    %s49 = smul.u32 4, %s48
    %s50 = sadd.s32 0, 0
    %s51 = smul.u32 4, %s50
    %v52 = vld [vmem:[#allocation2] sm:$0xff]
    %v53 = vld [vmem:[#allocation2 + $0x8] sm:$0xff]
    %v54 = vld [vmem:[#allocation2 + $0x10] sm:$0xff]
    %v55 = vld [vmem:[#allocation2 + $0x18] sm:$0xff]
    %v56 = vld [vmem:[#allocation5] sm:$0xff]
    %v57 = vld [vmem:[#allocation5 + $0x8] sm:$0xff]
    %v58 = vld [vmem:[#allocation5 + $0x10] sm:$0xff]
    %v59 = vld [vmem:[#allocation5 + $0x18] sm:$0xff]
    %vm60 = vcmp.gt.f32.partialorder %v56, 0.0
    %vm61 = vcmp.gt.f32.partialorder %v57, 0.0
    %vm62 = vcmp.gt.f32.partialorder %v58, 0.0
    %vm63 = vcmp.gt.f32.partialorder %v59, 0.0
    %v64 = vmul.f32 %v52, 0.5
    %v65 = vmul.f32 %v53, 0.5
    %v66 = vmul.f32 %v54, 0.5
    %v67 = vmul.f32 %v55, 0.5
    %v68 = vtanh.pop %v64
    %v69 = vtanh.pop %v65
    %v70 = vtanh.pop %v66
    %v71 = vtanh.pop %v67
    %v72 = vmul.f32 %v68, 0.5
    %v73 = vmul.f32 %v69, 0.5
    %v74 = vmul.f32 %v70, 0.5
    %v75 = vmul.f32 %v71, 0.5
    %v76 = vadd.f32 %v72, 0.5
    %v77 = vadd.f32 %v73, 0.5
    %v78 = vadd.f32 %v74, 0.5
    %v79 = vadd.f32 %v75, 0.5
    %v80 = vsub.f32 1.0, %v76
    %v81 = vsub.f32 1.0, %v77
    %v82 = vsub.f32 1.0, %v78
    %v83 = vsub.f32 1.0, %v79
    %v84 = vadd.f32 %v80, 0.05
    %v85 = vadd.f32 %v81, 0.05
    %v86 = vadd.f32 %v82, 0.05
    %v87 = vadd.f32 %v83, 0.05
    %v88 = vmin.f32 %v84, 1.0
    %v89 = vmin.f32 %v85, 1.0
    %v90 = vmin.f32 %v86, 1.0
    %v91 = vmin.f32 %v87, 1.0
    %v92 = vsel %vm60, %v76, %v88
    %v93 = vsel %vm61, %v77, %v89
    %v94 = vsel %vm62, %v78, %v90
    %v95 = vsel %vm63, %v79, %v91
    %v96 = vmax.f32 %v92, 1e-08
    %v97 = vmax.f32 %v93, 1e-08
    %v98 = vmax.f32 %v94, 1e-08
    %v99 = vmax.f32 %v95, 1e-08
    %v100 = vlog2.pop %v96
    %v101 = vmul.f32 %v100, 0.6931472
    %v102 = vlog2.pop %v97
    %v103 = vmul.f32 %v102, 0.6931472
    %v104 = vlog2.pop %v98
    %v105 = vmul.f32 %v104, 0.6931472
    %v106 = vlog2.pop %v99
    %v107 = vmul.f32 %v106, 0.6931472
    %v108 = vsub.f32 1.0, %v88
    %v109 = vsub.f32 1.0, %v89
    %v110 = vsub.f32 1.0, %v90
    %v111 = vsub.f32 1.0, %v91
    %v112 = vmul.f32 %v108, %v108
    %v113 = vmul.f32 %v109, %v109
    %v114 = vmul.f32 %v110, %v110
    %v115 = vmul.f32 %v111, %v111
    %v116 = vmul.f32 %v112, %v112
    %v117 = vmul.f32 %v113, %v113
    %v118 = vmul.f32 %v114, %v114
    %v119 = vmul.f32 %v115, %v115
    %v120 = vsel %vm60, %v80, %v116
    %v121 = vsel %vm61, %v81, %v117
    %v122 = vsel %vm62, %v82, %v118
    %v123 = vsel %vm63, %v83, %v119
    %v124 = vmul.f32 %v101, %v120
    %v125 = vmul.f32 %v103, %v121
    %v126 = vmul.f32 %v105, %v122
    %v127 = vmul.f32 %v107, %v123
    %v128 = vadd.f32 %v124, %v125
    %v129 = vadd.f32 %v128, %v126
    %v130 = vadd.f32 %v129, %v127
    %p131 = scmp.eq.s32.totalorder 0, 0
    // Predicated region
    $region18: #{tpu_custom_call.1} parent=1 // pred_check
      %p132 = pneg %p131
    $region19: #{tpu_custom_call.1} parent=1 // pred_check_branch
      %134 = sbr.rel (%p132) target = $region21
    $region20: #{tpu_custom_call.1} parent=1 // pred_region
      %135 = vst [vmem:[#allocation7] sm:$0xff] %v130
    $region21: #{tpu_custom_call.1} parent=1 // pred_fallthru
      _
    %p136 = scmp.ne.s32.totalorder 0, 0
    // Predicated region
    $region22: #{tpu_custom_call.1} parent=1 // pred_check
      %p137 = pneg %p136
    $region23: #{tpu_custom_call.1} parent=1 // pred_check_branch
      %139 = sbr.rel (%p137) target = $region25
    $region24: #{tpu_custom_call.1} parent=1 // pred_region
      %v140 = vld [vmem:[#allocation7] sm:$0xff]
      %v141 = vadd.f32 %v140, %v130
      %142 = vst [vmem:[#allocation7] sm:$0xff] %v141
    $region25: #{tpu_custom_call.1} parent=1 // pred_fallthru
      _
    // Predicated region
    $region26: #{tpu_custom_call.1} parent=1 // pred_check
      _
    $region27: #{tpu_custom_call.1} parent=1 // pred_check_branch
      %144 = sbr.rel (0) target = $region29
    $region28: #{tpu_custom_call.1} parent=1 // pred_region
      %s146 = ssub.s32 128, 128
      %147 = vsyncadd [#allocation4], %s146
      %s149 = sshll.u32 [#allocation7], 4
      %s150 = int_to_ptr.vmem [resolvable:$true] %s149
      %152 = dma.vmem_to_hbm [thread:$0]  %s150, 128, %s2, [#allocation4]
    $region29: #{tpu_custom_call.1} parent=1 // pred_fallthru
      _
    // Predicated region
    $region30: #{tpu_custom_call.1} parent=1 // pred_check
      _
    $region31: #{tpu_custom_call.1} parent=1 // pred_check_branch
      %154 = sbr.rel (0) target = $region33
    $region32: #{tpu_custom_call.1} parent=1 // pred_region
      %155 = dma.done [#allocation4], 128
    $region33: #{tpu_custom_call.1} parent=1 // pred_fallthru
      _
    %156 = vsyncpa [#allocation3], 1
    %157 = vsyncpa [#allocation6], 1
    %158 = vsyncpa [#allocation4], 1

</llo_original>
